<compile_context>
chip_gen: v7x
topology: tpu7x:2x2x1
jax: 0.10.0
libtpu: 0.0.40
codegen_flags: <defaults>
</compile_context>

<pallas_src>
import jax
import jax.numpy as jnp
from jax import lax
from jax.experimental import pallas as pl
from jax.experimental.pallas import tpu as pltpu

EPS = 1e-5          # PyTorch BatchNorm2d default
TM1_MAX = 512       # pass-1 rows of A per grid step
TM2_BLOCKS = 8      # pass-2 M tile = up to 8x pass-1's (purely HBM-bound pass)
TK_MAX = 1024       # pass-1 K-reduction tile (multiple of 256 for v6e/v7x MXU)


def _round_up(x, m):
    return (x + m - 1) // m * m


def _vmem_limit_bytes():
    """~3/4 of physical VMEM, capped at 96 MiB (fits v5e/v6e 128 MiB and v7x 64 MiB)."""
    try:
        cap = pltpu.get_tpu_info().vmem_capacity_bytes
    except Exception:
        cap = 64 * 1024 * 1024
    return max(32 * 1024 * 1024, min(int(cap * 3 // 4), 96 * 1024 * 1024))


VMEM_LIMIT = _vmem_limit_bytes()


def _pick_tk(kp, tk_max=TK_MAX):
    """Largest K tile <= tk_max that divides kp (kp is a multiple of 128)."""
    if kp <= tk_max:
        return kp
    for cand in (1024, 512, 256, 128):
        if cand <= tk_max and kp % cand == 0:
            return cand
    return 128


# ------------------------------ kernels ------------------------------------ #

def conv_stats_kernel(a_ref, w_ref, y_ref, stats_ref, acc_ref):
    """One (M tile, K tile) step: conv-as-matmul with f32 accumulation.

    On the last K step: store the bf16 conv tile plus per-tile BN partial sums
    (sum, sum-of-squares) computed from the f32 accumulator.
    """
    k = pl.program_id(1)

    @pl.when(k == 0)
    def _():
        acc_ref[...] = jnp.zeros_like(acc_ref)

    acc_ref[...] += jnp.dot(a_ref[...], w_ref[...],
                            preferred_element_type=jnp.float32)

    @pl.when(k == pl.num_programs(1) - 1)
    def _():
        acc = acc_ref[...]
        y_ref[...] = acc.astype(y_ref.dtype)                          # bf16 intermediate
        stats_ref[0, :1, :] = jnp.sum(acc, axis=0, keepdims=True)     # sum
        stats_ref[0, 1:, :] = jnp.sum(acc * acc, axis=0, keepdims=True)  # sum of squares


def bn_relu_kernel(y_ref, scale_ref, bias_ref, o_ref):
    """One M tile: folded BatchNorm (single FMA) followed by ReLU. bf16 in/out."""
    y = y_ref[...].astype(jnp.float32)
    o_ref[...] = jnp.maximum(y * scale_ref[...] + bias_ref[...], 0.0).astype(o_ref.dtype)


# ------------------------------ wrapper ------------------------------------ #

def _im2col_bf16(x, kh=4, kw=4, stride=2, pad=1):
    """x: (N, C, H, W) -> A: (N*OH*OW, C*kh*kw) in bf16, K index = c*kh*kw + i*kw + j."""
    n, c, h, w = x.shape
    oh = (h + 2 * pad - kh) // stride + 1
    ow = (w + 2 * pad - kw) // stride + 1
    xb = x.astype(jnp.bfloat16)                       # cast BEFORE im2col (half traffic)
    xp = jnp.pad(xb, ((0, 0), (0, 0), (pad, pad), (pad, pad)))
    cols = []
    for i in range(kh):
        for j in range(kw):
            cols.append(xp[:, :, i:i + stride * oh:stride, j:j + stride * ow:stride])
    patches = jnp.stack(cols, axis=2)                  # (N, C, kh*kw, OH, OW)
    patches = patches.reshape(n, c * kh * kw, oh, ow)  # (N, K, OH, OW)
    a = jnp.transpose(patches, (0, 2, 3, 1)).reshape(n * oh * ow, c * kh * kw)
    return a, (n, oh, ow)


def unet_block_down(x, conv_w, gamma, beta, eps=EPS):
    """x: (N, Cin, H, W) NCHW; conv_w: (Cout, Cin, 4, 4); gamma/beta: (Cout,)."""
    cout, cin, kh, kw = conv_w.shape
    a, (n, oh, ow) = _im2col_bf16(x, kh, kw, stride=2, pad=1)
    m, k = a.shape

    # Lane-align K and Cout to 128.
    kp = _round_up(k, 128)
    cp = _round_up(cout, 128)

    # M tiling: tm1 for pass 1, tm2 = mult * tm1 for pass 2 (bigger, HBM-bound pass).
    tm1 = min(TM1_MAX, _round_up(m, 8))
    mult = max(1, min(TM2_BLOCKS, -(-m // tm1)))
    tm2 = tm1 * mult
    mp = _round_up(m, tm2)              # divisible by both tm1 and tm2
    n_tiles1 = mp // tm1
    n_tiles2 = mp // tm2

    tk = _pick_tk(kp)
    n_ktiles = kp // tk

    # Padded bf16 operands, built in a single pad pass (no zeros+scatter).
    a_p = jnp.pad(a, ((0, mp - m), (0, kp - k)))                       # (Mp, Kp) bf16
    w_mat = conv_w.reshape(cout, cin * kh * kw).T.astype(jnp.bfloat16)  # (K, Cout)
    w_p = jnp.pad(w_mat, ((0, kp - k), (0, cp - cout)))                # (Kp, Cp) bf16
    gamma_p = jnp.pad(gamma.astype(jnp.float32), (0, cp - cout))
    beta_p = jnp.pad(beta.astype(jnp.float32), (0, cp - cout))

    # ---- Pass 1: K-tiled conv matmul + per-M-tile BN partial statistics ---- #
    y, stats = pl.pallas_call(
        conv_stats_kernel,
        out_shape=(jax.ShapeDtypeStruct((mp, cp), jnp.bfloat16),
                   jax.ShapeDtypeStruct((n_tiles1, 2, cp), jnp.float32)),
        grid=(n_tiles1, n_ktiles),
        in_specs=[
            pl.BlockSpec((tm1, tk), lambda i, kk: (i, kk)),
            pl.BlockSpec((tk, cp), lambda i, kk: (kk, 0)),
        ],
        out_specs=(
            pl.BlockSpec((tm1, cp), lambda i, kk: (i, 0)),
            pl.BlockSpec((1, 2, cp), lambda i, kk: (i, 0, 0)),
        ),
        scratch_shapes=[pltpu.VMEM((tm1, cp), jnp.float32)],
        compiler_params=pltpu.CompilerParams(
            dimension_semantics=(pltpu.PARALLEL, pltpu.ARBITRARY),
            vmem_limit_bytes=VMEM_LIMIT),
    )(a_p, w_p)

    # ---- Tiny reduction: fold BN stats + gamma/beta into scale/bias ---- #
    total = jnp.sum(stats, axis=0)                   # (2, Cp)
    inv_m = 1.0 / float(m)                           # true M (padded rows are zero)
    mean = total[0] * inv_m
    var = jnp.maximum(total[1] * inv_m - mean * mean, 0.0)   # biased var (training BN)
    scale = gamma_p * lax.rsqrt(var + eps)
    bias = beta_p - mean * scale

    # ---- Pass 2: tiled normalize + ReLU (bf16, in-place over y's buffer) ---- #
    out2 = pl.pallas_call(
        bn_relu_kernel,
        out_shape=jax.ShapeDtypeStruct((mp, cp), jnp.bfloat16),
        grid=(n_tiles2,),
        in_specs=[
            pl.BlockSpec((tm2, cp), lambda i: (i, 0)),
            pl.BlockSpec((1, cp), lambda i: (0, 0)),
            pl.BlockSpec((1, cp), lambda i: (0, 0)),
        ],
        out_specs=pl.BlockSpec((tm2, cp), lambda i: (i, 0)),
        input_output_aliases={0: 0},
        compiler_params=pltpu.CompilerParams(
            dimension_semantics=(pltpu.PARALLEL,),
            vmem_limit_bytes=VMEM_LIMIT),
    )(y, scale.reshape(1, cp), bias.reshape(1, cp))

    # (Mp, Cp) -> crop padding -> (N, OH, OW, Cout) -> NCHW (module contract).
    out = out2[:m, :cout].reshape(n, oh, ow, cout)
    return jnp.transpose(out, (0, 3, 1, 2)).astype(x.dtype)


def _reference(x, conv_w, gamma, beta, eps=EPS):
    """Pure-JAX f32 reference: Conv2d(4,2,1,bias=False) + BatchNorm2d(train) + ReLU."""
    y = lax.conv_general_dilated(x, conv_w, window_strides=(2, 2),
                                 padding=((1, 1), (1, 1)),
                                 dimension_numbers=("NCHW", "OIHW", "NCHW"))
    mean = y.mean(axis=(0, 2, 3), keepdims=True)
    var = ((y - mean) ** 2).mean(axis=(0, 2, 3), keepdims=True)
    y_hat = (y - mean) * lax.rsqrt(var + eps)
    out = y_hat * gamma.reshape(1, -1, 1, 1) + beta.reshape(1, -1, 1, 1)
    return jnp.maximum(out, 0.0)


if __name__ == "__main__":
    key = jax.random.PRNGKey(0)
    k_x, k_w = jax.random.split(key)

    N, C_IN, C_OUT, H, W = 2, 3, 3, 16, 16
    x = jax.random.normal(k_x, (N, C_IN, H, W), dtype=jnp.float32)

    # PyTorch-like init: kaiming-uniform-ish conv weight; BN weight=1, bias=0.
    fan_in = C_IN * 4 * 4
    bound = (1.0 / fan_in) ** 0.5
    conv_w = jax.random.uniform(k_w, (C_OUT, C_IN, 4, 4),
                                minval=-bound, maxval=bound, dtype=jnp.float32)
    gamma = jnp.ones((C_OUT,), jnp.float32)
    beta = jnp.zeros((C_OUT,), jnp.float32)

    run = jax.jit(unet_block_down)
    out = jax.block_until_ready(run(x, conv_w, gamma, beta))
    assert out.shape == (N, C_OUT, H // 2, W // 2), out.shape

    ref = jax.block_until_ready(_reference(x, conv_w, gamma, beta))
    max_err = float(jnp.max(jnp.abs(out - ref)))
    assert max_err < 1e-1, f"max abs err vs f32 reference: {max_err}"

    print("KERNEL_OK")
</pallas_src>

<mosaic_0001>
module attributes {stable_mosaic.version = 11 : i64} {
  func.func @conv_stats_kernel(%arg0: i32, %arg1: i32, %arg2: memref<128x128xbf16, #tpu.memory_space<vmem>>, %arg3: memref<128x128xbf16, #tpu.memory_space<vmem>>, %arg4: memref<128x128xbf16, #tpu.memory_space<vmem>>, %arg5: memref<1x2x128xf32, #tpu.memory_space<vmem>>, %arg6: memref<128x128xf32, #tpu.memory_space<vmem>>) attributes {dimension_semantics = [#tpu.dimension_semantics<parallel>, #tpu.dimension_semantics<arbitrary>], iteration_bounds = array<i64: 1, 1>, scalar_prefetch = 0 : i64, scratch_operands = 1 : i64, tpu.core_type = #tpu.core_type<tc>, window_params = [{transform_indices = @transform_0, window_bounds = array<i64: 128, 128>}, {transform_indices = @transform_1, window_bounds = array<i64: 128, 128>}, {transform_indices = @transform_2, window_bounds = array<i64: 128, 128>}, {transform_indices = @transform_3, window_bounds = array<i64: 1, 2, 128>}]} {
    %c0_i32 = arith.constant 0 : i32
    %0 = arith.cmpi eq, %arg1, %c0_i32 : i32
    %1 = arith.extui %0 : i1 to i32
    %c0_i32_0 = arith.constant 0 : i32
    %2 = arith.cmpi ne, %1, %c0_i32_0 : i32
    scf.if %2 {
      %cst_10 = arith.constant 0.000000e+00 : f32
      %12 = vector.broadcast %cst_10 : f32 to vector<128x128xf32>
      %c0_11 = arith.constant 0 : index
      %c0_12 = arith.constant 0 : index
      %13 = vector.load %arg6[%c0_11, %c0_12] : memref<128x128xf32, #tpu.memory_space<vmem>>, vector<128x128xf32>
      tpu.vector_store %arg6[%c0_11, %c0_12], %12 {strides = array<i32>} : memref<128x128xf32, #tpu.memory_space<vmem>>, vector<128x128xf32>,
    } else {
    }
    %c0 = arith.constant 0 : index
    %c0_1 = arith.constant 0 : index
    %3 = vector.load %arg6[%c0, %c0_1] : memref<128x128xf32, #tpu.memory_space<vmem>>, vector<128x128xf32>
    %c0_2 = arith.constant 0 : index
    %c0_3 = arith.constant 0 : index
    %4 = vector.load %arg2[%c0_2, %c0_3] : memref<128x128xbf16, #tpu.memory_space<vmem>>, vector<128x128xbf16>
    %c0_4 = arith.constant 0 : index
    %c0_5 = arith.constant 0 : index
    %5 = vector.load %arg3[%c0_4, %c0_5] : memref<128x128xbf16, #tpu.memory_space<vmem>>, vector<128x128xbf16>
    %cst = arith.constant dense<0.000000e+00> : vector<128x128xf32>
    %6 = tpu.matmul %4, %5, %cst {dimension_numbers = #tpu.dot_dimension_numbers<[1], [0], [0], [1], [0, 0, 1, 1], [], []>} : vector<128x128xbf16>, vector<128x128xbf16>, vector<128x128xf32> -> vector<128x128xf32>
    %7 = arith.addf %3, %6 : vector<128x128xf32>
    %c0_6 = arith.constant 0 : index
    %c0_7 = arith.constant 0 : index
    %8 = vector.load %arg6[%c0_6, %c0_7] : memref<128x128xf32, #tpu.memory_space<vmem>>, vector<128x128xf32>
    tpu.vector_store %arg6[%c0_6, %c0_7], %7 {strides = array<i32>} : memref<128x128xf32, #tpu.memory_space<vmem>>, vector<128x128xf32>,
    %c0_i32_8 = arith.constant 0 : i32
    %9 = arith.cmpi eq, %arg1, %c0_i32_8 : i32
    %10 = arith.extui %9 : i1 to i32
    %c0_i32_9 = arith.constant 0 : i32
    %11 = arith.cmpi ne, %10, %c0_i32_9 : i32
    scf.if %11 {
      %c0_10 = arith.constant 0 : index
      %c0_11 = arith.constant 0 : index
      %12 = vector.load %arg6[%c0_10, %c0_11] : memref<128x128xf32, #tpu.memory_space<vmem>>, vector<128x128xf32>
      %13 = arith.truncf %12 : vector<128x128xf32> to vector<128x128xbf16>
      %c0_12 = arith.constant 0 : index
      %c0_13 = arith.constant 0 : index
      %14 = vector.load %arg4[%c0_12, %c0_13] : memref<128x128xbf16, #tpu.memory_space<vmem>>, vector<128x128xbf16>
      tpu.vector_store %arg4[%c0_12, %c0_13], %13 {strides = array<i32>} : memref<128x128xbf16, #tpu.memory_space<vmem>>, vector<128x128xbf16>,
      %cst_14 = arith.constant dense<0.000000e+00> : vector<128xf32>
      %15 = vector.multi_reduction <add>, %12, %cst_14 [0] : vector<128x128xf32> to vector<128xf32>
      %16 = vector.shape_cast %15 : vector<128xf32> to vector<1x128xf32>
      %c0_15 = arith.constant 0 : index
      %c0_16 = arith.constant 0 : index
      %c0_17 = arith.constant 0 : index
      %17 = vector.load %arg5[%c0_15, %c0_16, %c0_17] : memref<1x2x128xf32, #tpu.memory_space<vmem>>, vector<1x1x128xf32>
      %18 = vector.shape_cast %17 : vector<1x1x128xf32> to vector<1x128xf32>
      %19 = vector.shape_cast %16 : vector<1x128xf32> to vector<1x1x128xf32>
      tpu.vector_store %arg5[%c0_15, %c0_16, %c0_17], %19 {strides = array<i32>} : memref<1x2x128xf32, #tpu.memory_space<vmem>>, vector<1x1x128xf32>,
      %20 = arith.mulf %12, %12 : vector<128x128xf32>
      %cst_18 = arith.constant dense<0.000000e+00> : vector<128xf32>
      %21 = vector.multi_reduction <add>, %20, %cst_18 [0] : vector<128x128xf32> to vector<128xf32>
      %22 = vector.shape_cast %21 : vector<128xf32> to vector<1x128xf32>
      %c0_19 = arith.constant 0 : index
      %c1 = arith.constant 1 : index
      %c0_20 = arith.constant 0 : index
      %23 = vector.load %arg5[%c0_19, %c1, %c0_20] : memref<1x2x128xf32, #tpu.memory_space<vmem>>, vector<1x1x128xf32>
      %24 = vector.shape_cast %23 : vector<1x1x128xf32> to vector<1x128xf32>
      %25 = vector.shape_cast %22 : vector<1x128xf32> to vector<1x1x128xf32>
      tpu.vector_store %arg5[%c0_19, %c1, %c0_20], %25 {strides = array<i32>} : memref<1x2x128xf32, #tpu.memory_space<vmem>>, vector<1x1x128xf32>,
    } else {
    }
    return
  }
  func.func @transform_0(%arg0: i32, %arg1: i32) -> (i32, i32) {
    %c0_i32 = arith.constant 0 : i32
    return %arg0, %arg1 : i32, i32
  }
  func.func @transform_1(%arg0: i32, %arg1: i32) -> (i32, i32) {
    %c0_i32 = arith.constant 0 : i32
    %c0_i32_0 = arith.constant 0 : i32
    return %arg1, %c0_i32 : i32, i32
  }
  func.func @transform_2(%arg0: i32, %arg1: i32) -> (i32, i32) {
    %c0_i32 = arith.constant 0 : i32
    %c0_i32_0 = arith.constant 0 : i32
    return %arg0, %c0_i32 : i32, i32
  }
  func.func @transform_3(%arg0: i32, %arg1: i32) -> (i32, i32, i32) {
    %c0_i32 = arith.constant 0 : i32
    %c0_i32_0 = arith.constant 0 : i32
    %c0_i32_1 = arith.constant 0 : i32
    return %arg0, %c0_i32, %c0_i32_0 : i32, i32, i32
  }
}

module attributes {stable_mosaic.version = 11 : i64} {
  func.func @bn_relu_kernel(%arg0: i32, %arg1: memref<128x128xbf16, #tpu.memory_space<vmem>>, %arg2: memref<1x128xf32, #tpu.memory_space<vmem>>, %arg3: memref<1x128xf32, #tpu.memory_space<vmem>>, %arg4: memref<128x128xbf16, #tpu.memory_space<vmem>>) attributes {dimension_semantics = [#tpu.dimension_semantics<parallel>], iteration_bounds = array<i64: 1>, scalar_prefetch = 0 : i64, scratch_operands = 0 : i64, tpu.core_type = #tpu.core_type<tc>, window_params = [{transform_indices = @transform_0, window_bounds = array<i64: 128, 128>}, {pipeline_mode = #tpu.pipeline_mode<synchronous>, transform_indices = @transform_1, window_bounds = array<i64: 1, 128>}, {pipeline_mode = #tpu.pipeline_mode<synchronous>, transform_indices = @transform_2, window_bounds = array<i64: 1, 128>}, {transform_indices = @transform_3, window_bounds = array<i64: 128, 128>}]} {
    %c0 = arith.constant 0 : index
    %c0_0 = arith.constant 0 : index
    %0 = vector.load %arg1[%c0, %c0_0] : memref<128x128xbf16, #tpu.memory_space<vmem>>, vector<128x128xbf16>
    %1 = arith.extf %0 : vector<128x128xbf16> to vector<128x128xf32>
    %c0_1 = arith.constant 0 : index
    %c0_2 = arith.constant 0 : index
    %2 = vector.load %arg2[%c0_1, %c0_2] : memref<1x128xf32, #tpu.memory_space<vmem>>, vector<1x128xf32>
    %3 = vector.broadcast %2 : vector<1x128xf32> to vector<128x128xf32>
    %4 = arith.mulf %1, %3 : vector<128x128xf32>
    %c0_3 = arith.constant 0 : index
    %c0_4 = arith.constant 0 : index
    %5 = vector.load %arg3[%c0_3, %c0_4] : memref<1x128xf32, #tpu.memory_space<vmem>>, vector<1x128xf32>
    %6 = vector.broadcast %5 : vector<1x128xf32> to vector<128x128xf32>
    %7 = arith.addf %4, %6 : vector<128x128xf32>
    %cst = arith.constant 0.000000e+00 : f32
    %8 = vector.broadcast %cst : f32 to vector<128x128xf32>
    %9 = arith.maximumf %7, %8 : vector<128x128xf32>
    %10 = arith.truncf %9 : vector<128x128xf32> to vector<128x128xbf16>
    %c0_5 = arith.constant 0 : index
    %c0_6 = arith.constant 0 : index
    %11 = vector.load %arg4[%c0_5, %c0_6] : memref<128x128xbf16, #tpu.memory_space<vmem>>, vector<128x128xbf16>
    tpu.vector_store %arg4[%c0_5, %c0_6], %10 {strides = array<i32>} : memref<128x128xbf16, #tpu.memory_space<vmem>>, vector<128x128xbf16>,
    return
  }
  func.func @transform_0(%arg0: i32) -> (i32, i32) {
    %c0_i32 = arith.constant 0 : i32
    %c0_i32_0 = arith.constant 0 : i32
    return %arg0, %c0_i32 : i32, i32
  }
  func.func @transform_1(%arg0: i32) -> (i32, i32) {
    %c0_i32 = arith.constant 0 : i32
    %c0_i32_0 = arith.constant 0 : i32
    %c0_i32_1 = arith.constant 0 : i32
    return %c0_i32, %c0_i32_0 : i32, i32
  }
  func.func @transform_2(%arg0: i32) -> (i32, i32) {
    %c0_i32 = arith.constant 0 : i32
    %c0_i32_0 = arith.constant 0 : i32
    %c0_i32_1 = arith.constant 0 : i32
    return %c0_i32, %c0_i32_0 : i32, i32
  }
  func.func @transform_3(%arg0: i32) -> (i32, i32) {
    %c0_i32 = arith.constant 0 : i32
    %c0_i32_0 = arith.constant 0 : i32
    return %arg0, %c0_i32 : i32, i32
  }
}

</mosaic_0001>

<llo_original>
// kernel: unet_block_down.3
$region0: #{unet_block_down.3}
  #allocation0 [shape = 'u32[]', space=smem, size = 0x4, offset = 0x4, fixed_abs, tag = 'smem constant byte address 0x4 - core index']
  #allocation1 [shape = 'u32[144,128]{1,0:T(1,128)}', space=vmem, size = 0x12000, scoped, tag = 'internal scratch']
  %s0 = inlined_call_operand.vmem [shape: bf16[128,128], index: 0, kind: input, shape index: {}, may-alias: {0,3}]
  %s1 = inlined_call_operand.vmem [shape: f32[1,128], index: 1, kind: input, shape index: {}]
  %s2 = inlined_call_operand.vmem [shape: f32[1,128], index: 2, kind: input, shape index: {}]
  %s3 = inlined_call_operand.vmem [shape: bf16[128,128], index: 3, kind: output, shape index: {}, may-alias: {0,3}]
  %s4 = sld [smem:[#allocation0]]
  $region22: #{unet_block_down.3} parent=0
    _
  %s6 = ssub.s32 1, %s4
  %s7 = scalar_select 0, %s6, %s4
  // Predicated region
  $region2: #{unet_block_down.3} parent=0 // pred_check
    _
  $region3: #{unet_block_down.3} parent=0 // pred_check_branch
    %9 = sbr.rel (0) target = $region5
  $region4: #{unet_block_down.3} parent=0 // pred_region
    _
  $region5: #{unet_block_down.3} parent=0 // pred_fallthru
    _
  // Predicated region
  $region6: #{unet_block_down.3} parent=0 // pred_check
    _
  $region7: #{unet_block_down.3} parent=0 // pred_check_branch
    %11 = sbr.rel (0) target = $region9
  $region8: #{unet_block_down.3} parent=0 // pred_region
    _
  $region9: #{unet_block_down.3} parent=0 // pred_fallthru
    _
  // Predicated region
  $region10: #{unet_block_down.3} parent=0 // pred_check
    _
  $region11: #{unet_block_down.3} parent=0 // pred_check_branch
    %13 = sbr.rel (0) target = $region13
  $region12: #{unet_block_down.3} parent=0 // pred_region
    _
  $region13: #{unet_block_down.3} parent=0 // pred_fallthru
    _
  %v14 = vld [vmem:[%s0] sm:$0xf]
  %v15 = vld [vmem:[%s0 + $0x4] sm:$0xf]
  %v16 = vld [vmem:[%s0 + $0x8] sm:$0xf]
  %v17 = vld [vmem:[%s0 + $0xc] sm:$0xf]
  %v18 = vld [vmem:[%s0 + $0x10] sm:$0xf]
  %v19 = vld [vmem:[%s0 + $0x14] sm:$0xf]
  %v20 = vld [vmem:[%s0 + $0x18] sm:$0xf]
  %v21 = vld [vmem:[%s0 + $0x1c] sm:$0xf]
  %v22 = vld [vmem:[%s0 + $0x20] sm:$0xf]
  %v23 = vld [vmem:[%s0 + $0x24] sm:$0xf]
  %v24 = vld [vmem:[%s0 + $0x28] sm:$0xf]
  %v25 = vld [vmem:[%s0 + $0x2c] sm:$0xf]
  %v26 = vld [vmem:[%s0 + $0x30] sm:$0xf]
  %v27 = vld [vmem:[%s0 + $0x34] sm:$0xf]
  %v28 = vld [vmem:[%s0 + $0x38] sm:$0xf]
  %v29 = vld [vmem:[%s0 + $0x3c] sm:$0xf]
  %v30 = vunpack.c.l.bf16 %v14
  %v31 = vunpack.c.l.bf16 %v15
  %v32 = vunpack.c.l.bf16 %v16
  %v33 = vunpack.c.l.bf16 %v17
  %v34 = vunpack.c.l.bf16 %v18
  %v35 = vunpack.c.l.bf16 %v19
  %v36 = vunpack.c.l.bf16 %v20
  %v37 = vunpack.c.l.bf16 %v21
  %v38 = vunpack.c.l.bf16 %v22
  %v39 = vunpack.c.l.bf16 %v23
  %v40 = vunpack.c.l.bf16 %v24
  %v41 = vunpack.c.l.bf16 %v25
  %v42 = vunpack.c.l.bf16 %v26
  %v43 = vunpack.c.l.bf16 %v27
  %v44 = vunpack.c.l.bf16 %v28
  %v45 = vunpack.c.l.bf16 %v29
  %v46 = vld [vmem:[%s1] sm:$0x1]
  %v48 = vlaneseq
  %v49 = vshrl.u32 %v48, 7
  %v50 = vsub.s32 0, %v49
  %v51 = vrot.slane %v46, %v50
  %v53 = vmul.f32 %v30, %v51
  %v54 = vmul.f32 %v31, %v51
  %v55 = vmul.f32 %v32, %v51
  %v56 = vmul.f32 %v33, %v51
  %v57 = vmul.f32 %v34, %v51
  %v58 = vmul.f32 %v35, %v51
  %v59 = vmul.f32 %v36, %v51
  %v60 = vmul.f32 %v37, %v51
  %v61 = vmul.f32 %v38, %v51
  %v62 = vmul.f32 %v39, %v51
  %v63 = vmul.f32 %v40, %v51
  %v64 = vmul.f32 %v41, %v51
  %v65 = vmul.f32 %v42, %v51
  %v66 = vmul.f32 %v43, %v51
  %v67 = vmul.f32 %v44, %v51
  %v68 = vmul.f32 %v45, %v51
  %v69 = vld [vmem:[%s2] sm:$0x1]
  %v71 = vlaneseq
  %v72 = vshrl.u32 %v71, 7
  %v73 = vsub.s32 0, %v72
  %v74 = vrot.slane %v69, %v73
  %v76 = vadd.f32 %v53, %v74
  %v77 = vadd.f32 %v54, %v74
  %v78 = vadd.f32 %v55, %v74
  %v79 = vadd.f32 %v56, %v74
  %v80 = vadd.f32 %v57, %v74
  %v81 = vadd.f32 %v58, %v74
  %v82 = vadd.f32 %v59, %v74
  %v83 = vadd.f32 %v60, %v74
  %v84 = vadd.f32 %v61, %v74
  %v85 = vadd.f32 %v62, %v74
  %v86 = vadd.f32 %v63, %v74
  %v87 = vadd.f32 %v64, %v74
  %v88 = vadd.f32 %v65, %v74
  %v89 = vadd.f32 %v66, %v74
  %v90 = vadd.f32 %v67, %v74
  %v91 = vadd.f32 %v68, %v74
  %v92 = vmax.f32 %v76, 0.0
  %v93 = vmax.f32 %v77, 0.0
  %v94 = vmax.f32 %v78, 0.0
  %v95 = vmax.f32 %v79, 0.0
  %v96 = vmax.f32 %v80, 0.0
  %v97 = vmax.f32 %v81, 0.0
  %v98 = vmax.f32 %v82, 0.0
  %v99 = vmax.f32 %v83, 0.0
  %v100 = vmax.f32 %v84, 0.0
  %v101 = vmax.f32 %v85, 0.0
  %v102 = vmax.f32 %v86, 0.0
  %v103 = vmax.f32 %v87, 0.0
  %v104 = vmax.f32 %v88, 0.0
  %v105 = vmax.f32 %v89, 0.0
  %v106 = vmax.f32 %v90, 0.0
  %v107 = vmax.f32 %v91, 0.0
  %v108 = vpack.c.bf16 %v93, %v92
  %v109 = vpack.c.bf16 %v95, %v94
  %v110 = vpack.c.bf16 %v97, %v96
  %v111 = vpack.c.bf16 %v99, %v98
  %v112 = vpack.c.bf16 %v101, %v100
  %v113 = vpack.c.bf16 %v103, %v102
  %v114 = vpack.c.bf16 %v105, %v104
  %v115 = vpack.c.bf16 %v107, %v106
  %v124 = vunpack.c.l.b16 %v108
  %v125 = vunpack.c.h.b16 %v108
  %v126 = vunpack.c.l.b16 %v109
  %v127 = vunpack.c.h.b16 %v109
  %v128 = vunpack.c.l.b16 %v110
  %v129 = vunpack.c.h.b16 %v110
  %v130 = vunpack.c.l.b16 %v111
  %v131 = vunpack.c.h.b16 %v111
  %v132 = vunpack.c.l.b16 %v112
  %v133 = vunpack.c.h.b16 %v112
  %v134 = vunpack.c.l.b16 %v113
  %v135 = vunpack.c.h.b16 %v113
  %v136 = vunpack.c.l.b16 %v114
  %v137 = vunpack.c.h.b16 %v114
  %v138 = vunpack.c.l.b16 %v115
  %v139 = vunpack.c.h.b16 %v115
  %v140 = vpack.c.b16 %v124, %v124
  %v141 = vpack.c.b16 %v125, %v125
  %v142 = vpack.c.b16 %v126, %v126
  %v143 = vpack.c.b16 %v127, %v127
  %v144 = vpack.c.b16 %v128, %v128
  %v145 = vpack.c.b16 %v129, %v129
  %v146 = vpack.c.b16 %v130, %v130
  %v147 = vpack.c.b16 %v131, %v131
  %v148 = vpack.c.b16 %v132, %v132
  %v149 = vpack.c.b16 %v133, %v133
  %v150 = vpack.c.b16 %v134, %v134
  %v151 = vpack.c.b16 %v135, %v135
  %v152 = vpack.c.b16 %v136, %v136
  %v153 = vpack.c.b16 %v137, %v137
  %v154 = vpack.c.b16 %v138, %v138
  %v155 = vpack.c.b16 %v139, %v139
  %172 = vst [vmem:[%s3] sm:$0xf] %v140
  %173 = vst [vmem:[%s3 + $0x4] sm:$0xf] %v141
  %174 = vst [vmem:[%s3 + $0x8] sm:$0xf] %v142
  %175 = vst [vmem:[%s3 + $0xc] sm:$0xf] %v143
  %176 = vst [vmem:[%s3 + $0x10] sm:$0xf] %v144
  %177 = vst [vmem:[%s3 + $0x14] sm:$0xf] %v145
  %178 = vst [vmem:[%s3 + $0x18] sm:$0xf] %v146
  %179 = vst [vmem:[%s3 + $0x1c] sm:$0xf] %v147
  %180 = vst [vmem:[%s3 + $0x20] sm:$0xf] %v148
  %181 = vst [vmem:[%s3 + $0x24] sm:$0xf] %v149
  %182 = vst [vmem:[%s3 + $0x28] sm:$0xf] %v150
  %183 = vst [vmem:[%s3 + $0x2c] sm:$0xf] %v151
  %184 = vst [vmem:[%s3 + $0x30] sm:$0xf] %v152
  %185 = vst [vmem:[%s3 + $0x34] sm:$0xf] %v153
  %186 = vst [vmem:[%s3 + $0x38] sm:$0xf] %v154
  %187 = vst [vmem:[%s3 + $0x3c] sm:$0xf] %v155
  // Predicated region
  $region14: #{unet_block_down.3} parent=0 // pred_check
    _
  $region15: #{unet_block_down.3} parent=0 // pred_check_branch
    %189 = sbr.rel (0) target = $region17
  $region16: #{unet_block_down.3} parent=0 // pred_region
    _
  $region17: #{unet_block_down.3} parent=0 // pred_fallthru
    _
  // Predicated region
  $region18: #{unet_block_down.3} parent=0 // pred_check
    _
  $region19: #{unet_block_down.3} parent=0 // pred_check_branch
    %191 = sbr.rel (0) target = $region21
  $region20: #{unet_block_down.3} parent=0 // pred_region
    _
  $region21: #{unet_block_down.3} parent=0 // pred_fallthru
    _

// kernel: unet_block_down.2
$region0: #{unet_block_down.2}
  #allocation0 [shape = 'u32[]', space=smem, size = 0x4, offset = 0x4, fixed_abs, tag = 'smem constant byte address 0x4 - core index']
  #allocation1 [shape = 'u32[144,128]{1,0:T(1,128)}', space=vmem, size = 0x12000, scoped, tag = 'internal scratch']
  #allocation2 [shape = 'f32[128,128]{1,0:T(8,128)}', space=vmem, size = 0x10000, scoped, tag = 'scratch operand']
  %s0 = inlined_call_operand.vmem [shape: bf16[128,128], index: 0, kind: input, shape index: {}]
  %s1 = inlined_call_operand.vmem [shape: bf16[128,128], index: 1, kind: input, shape index: {}]
  %s2 = inlined_call_operand.vmem [shape: bf16[128,128], index: 2, kind: output, shape index: {0}]
  %s3 = inlined_call_operand.vmem [shape: f32[1,2,128], index: 3, kind: output, shape index: {1}]
  %4 = xla_tuple %s2, %s3
  %s5 = sld [smem:[#allocation0]]
  $region34: #{unet_block_down.2} parent=0
    _
  %s7 = ssub.s32 1, %s5
  %s8 = scalar_select 0, %s7, %s5
  // Predicated region
  $region2: #{unet_block_down.2} parent=0 // pred_check
    _
  $region3: #{unet_block_down.2} parent=0 // pred_check_branch
    %10 = sbr.rel (0) target = $region5
  $region4: #{unet_block_down.2} parent=0 // pred_region
    _
  $region5: #{unet_block_down.2} parent=0 // pred_fallthru
    _
  // Predicated region
  $region6: #{unet_block_down.2} parent=0 // pred_check
    _
  $region7: #{unet_block_down.2} parent=0 // pred_check_branch
    %12 = sbr.rel (0) target = $region9
  $region8: #{unet_block_down.2} parent=0 // pred_region
    _
  $region9: #{unet_block_down.2} parent=0 // pred_fallthru
    _
  %p14 = scmp.eq.s32.totalorder 0, 0
  // Predicated region
  $region10: #{unet_block_down.2} parent=0 // pred_check
    %p15 = pneg %p14
  $region11: #{unet_block_down.2} parent=0 // pred_check_branch
    %17 = sbr.rel (%p15) target = $region13
  $region12: #{unet_block_down.2} parent=0 // pred_region
    %18 = vst [vmem:[#allocation2] sm:$0xff] 0.0
    %19 = vst [vmem:[#allocation2 + $0x8] sm:$0xff] 0.0
    %20 = vst [vmem:[#allocation2 + $0x10] sm:$0xff] 0.0
    %21 = vst [vmem:[#allocation2 + $0x18] sm:$0xff] 0.0
    %22 = vst [vmem:[#allocation2 + $0x20] sm:$0xff] 0.0
    %23 = vst [vmem:[#allocation2 + $0x28] sm:$0xff] 0.0
    %24 = vst [vmem:[#allocation2 + $0x30] sm:$0xff] 0.0
    %25 = vst [vmem:[#allocation2 + $0x38] sm:$0xff] 0.0
    %26 = vst [vmem:[#allocation2 + $0x40] sm:$0xff] 0.0
    %27 = vst [vmem:[#allocation2 + $0x48] sm:$0xff] 0.0
    %28 = vst [vmem:[#allocation2 + $0x50] sm:$0xff] 0.0
    %29 = vst [vmem:[#allocation2 + $0x58] sm:$0xff] 0.0
    %30 = vst [vmem:[#allocation2 + $0x60] sm:$0xff] 0.0
    %31 = vst [vmem:[#allocation2 + $0x68] sm:$0xff] 0.0
    %32 = vst [vmem:[#allocation2 + $0x70] sm:$0xff] 0.0
    %33 = vst [vmem:[#allocation2 + $0x78] sm:$0xff] 0.0
  $region13: #{unet_block_down.2} parent=0 // pred_fallthru
    _
  %v34 = vld [vmem:[#allocation2] sm:$0xff]
  %v35 = vld [vmem:[#allocation2 + $0x8] sm:$0xff]
  %v36 = vld [vmem:[#allocation2 + $0x10] sm:$0xff]
  %v37 = vld [vmem:[#allocation2 + $0x18] sm:$0xff]
  %v38 = vld [vmem:[#allocation2 + $0x20] sm:$0xff]
  %v39 = vld [vmem:[#allocation2 + $0x28] sm:$0xff]
  %v40 = vld [vmem:[#allocation2 + $0x30] sm:$0xff]
  %v41 = vld [vmem:[#allocation2 + $0x38] sm:$0xff]
  %v42 = vld [vmem:[#allocation2 + $0x40] sm:$0xff]
  %v43 = vld [vmem:[#allocation2 + $0x48] sm:$0xff]
  %v44 = vld [vmem:[#allocation2 + $0x50] sm:$0xff]
  %v45 = vld [vmem:[#allocation2 + $0x58] sm:$0xff]
  %v46 = vld [vmem:[#allocation2 + $0x60] sm:$0xff]
  %v47 = vld [vmem:[#allocation2 + $0x68] sm:$0xff]
  %v48 = vld [vmem:[#allocation2 + $0x70] sm:$0xff]
  %v49 = vld [vmem:[#allocation2 + $0x78] sm:$0xff]
  %v50 = vld [vmem:[%s0] sm:$0xf]
  %v51 = vld [vmem:[%s0 + $0x4] sm:$0xf]
  %v52 = vld [vmem:[%s0 + $0x8] sm:$0xf]
  %v53 = vld [vmem:[%s0 + $0xc] sm:$0xf]
  %v54 = vld [vmem:[%s0 + $0x10] sm:$0xf]
  %v55 = vld [vmem:[%s0 + $0x14] sm:$0xf]
  %v56 = vld [vmem:[%s0 + $0x18] sm:$0xf]
  %v57 = vld [vmem:[%s0 + $0x1c] sm:$0xf]
  %v58 = vld [vmem:[%s0 + $0x20] sm:$0xf]
  %v59 = vld [vmem:[%s0 + $0x24] sm:$0xf]
  %v60 = vld [vmem:[%s0 + $0x28] sm:$0xf]
  %v61 = vld [vmem:[%s0 + $0x2c] sm:$0xf]
  %v62 = vld [vmem:[%s0 + $0x30] sm:$0xf]
  %v63 = vld [vmem:[%s0 + $0x34] sm:$0xf]
  %v64 = vld [vmem:[%s0 + $0x38] sm:$0xf]
  %v65 = vld [vmem:[%s0 + $0x3c] sm:$0xf]
  %v66 = vld [vmem:[%s1] sm:$0xf]
  %v67 = vld [vmem:[%s1 + $0x4] sm:$0xf]
  %v68 = vld [vmem:[%s1 + $0x8] sm:$0xf]
  %v69 = vld [vmem:[%s1 + $0xc] sm:$0xf]
  %v70 = vld [vmem:[%s1 + $0x10] sm:$0xf]
  %v71 = vld [vmem:[%s1 + $0x14] sm:$0xf]
  %v72 = vld [vmem:[%s1 + $0x18] sm:$0xf]
  %v73 = vld [vmem:[%s1 + $0x1c] sm:$0xf]
  %v74 = vld [vmem:[%s1 + $0x20] sm:$0xf]
  %v75 = vld [vmem:[%s1 + $0x24] sm:$0xf]
  %v76 = vld [vmem:[%s1 + $0x28] sm:$0xf]
  %v77 = vld [vmem:[%s1 + $0x2c] sm:$0xf]
  %v78 = vld [vmem:[%s1 + $0x30] sm:$0xf]
  %v79 = vld [vmem:[%s1 + $0x34] sm:$0xf]
  %v80 = vld [vmem:[%s1 + $0x38] sm:$0xf]
  %v81 = vld [vmem:[%s1 + $0x3c] sm:$0xf]
  %v98 = vunpack.c.l.b16 %v50
  %v99 = vunpack.c.l.b16 %v51
  %v100 = vunpack.c.l.b16 %v52
  %v101 = vunpack.c.l.b16 %v53
  %v102 = vunpack.c.l.b16 %v54
  %v103 = vunpack.c.l.b16 %v55
  %v104 = vunpack.c.l.b16 %v56
  %v105 = vunpack.c.l.b16 %v57
  %v106 = vunpack.c.l.b16 %v58
  %v107 = vunpack.c.l.b16 %v59
  %v108 = vunpack.c.l.b16 %v60
  %v109 = vunpack.c.l.b16 %v61
  %v110 = vunpack.c.l.b16 %v62
  %v111 = vunpack.c.l.b16 %v63
  %v112 = vunpack.c.l.b16 %v64
  %v113 = vunpack.c.l.b16 %v65
  %v114 = vpack.c.b16 %v99, %v98
  %v115 = vpack.c.b16 %v101, %v100
  %v116 = vpack.c.b16 %v103, %v102
  %v117 = vpack.c.b16 %v105, %v104
  %v118 = vpack.c.b16 %v107, %v106
  %v119 = vpack.c.b16 %v109, %v108
  %v120 = vpack.c.b16 %v111, %v110
  %v121 = vpack.c.b16 %v113, %v112
  %v146 = vunpack.c.l.b16 %v66
  %v147 = vunpack.c.l.b16 %v67
  %v148 = vunpack.c.l.b16 %v68
  %v149 = vunpack.c.l.b16 %v69
  %v150 = vunpack.c.l.b16 %v70
  %v151 = vunpack.c.l.b16 %v71
  %v152 = vunpack.c.l.b16 %v72
  %v153 = vunpack.c.l.b16 %v73
  %v154 = vunpack.c.l.b16 %v74
  %v155 = vunpack.c.l.b16 %v75
  %v156 = vunpack.c.l.b16 %v76
  %v157 = vunpack.c.l.b16 %v77
  %v158 = vunpack.c.l.b16 %v78
  %v159 = vunpack.c.l.b16 %v79
  %v160 = vunpack.c.l.b16 %v80
  %v161 = vunpack.c.l.b16 %v81
  %v162 = vpack.c.b16 %v147, %v146
  %v163 = vpack.c.b16 %v149, %v148
  %v164 = vpack.c.b16 %v151, %v150
  %v165 = vpack.c.b16 %v153, %v152
  %v166 = vpack.c.b16 %v155, %v154
  %v167 = vpack.c.b16 %v157, %v156
  %v168 = vpack.c.b16 %v159, %v158
  %v169 = vpack.c.b16 %v161, %v160
  %178 = vmatprep.subr.bf16.mxu0 0
  %179 = vmatpush1.bf16.msra.mxu0 %v162
  %180 = vmatprep.subr.bf16.mxu0 0
  %181 = vmatpush1.bf16.msra.mxu0 %v163
  %182 = vmatprep.subr.bf16.mxu0 0
  %183 = vmatpush1.bf16.msra.mxu0 %v164
  %184 = vmatprep.subr.bf16.mxu0 0
  %185 = vmatpush1.bf16.msra.mxu0 %v165
  %186 = vmatprep.subr.bf16.mxu0 0
  %187 = vmatpush1.bf16.msra.mxu0 %v166
  %188 = vmatprep.subr.bf16.mxu0 0
  %189 = vmatpush1.bf16.msra.mxu0 %v167
  %190 = vmatprep.subr.bf16.mxu0 0
  %191 = vmatpush1.bf16.msra.mxu0 %v168
  %192 = vmatprep.subr.bf16.mxu0 0
  %193 = vmatpush1.bf16.msra.mxu0 %v169
  %194 = vmatprep.subr.bf16.mxu0 0
  %195 = vmatpush1.bf16.msra.mxu0 0
  %196 = vmatprep.subr.bf16.mxu0 0
  %197 = vmatpush1.bf16.msra.mxu0 0
  %198 = vmatprep.subr.bf16.mxu0 0
  %199 = vmatpush1.bf16.msra.mxu0 0
  %200 = vmatprep.subr.bf16.mxu0 0
  %201 = vmatpush1.bf16.msra.mxu0 0
  %202 = vmatprep.subr.bf16.mxu0 0
  %203 = vmatpush1.bf16.msra.mxu0 0
  %204 = vmatprep.subr.bf16.mxu0 0
  %205 = vmatpush1.bf16.msra.mxu0 0
  %206 = vmatprep.subr.bf16.mxu0 0
  %207 = vmatpush1.bf16.msra.mxu0 0
  %208 = vmatprep.subr.bf16.mxu0 0
  %209 = vmatpush1.bf16.msra.mxu0 0
  %210 = vmatprep.mubr.bf16.mxu0 0
  %211 = vmatmul.mubr.bf16.gmra.mrb[0].mxu0 %v114
  %v212 = vpop.f32.mrb[0].mxu0
  %v213 = vadd.f32 0.0, %v212
  %v214 = vpop.f32.mrb[0].mxu0
  %v215 = vpop.f32.mrb[0].mxu0
  %v216 = vadd.f32 0.0, %v215
  %v217 = vpop.f32.mrb[0].mxu0
  %218 = vmatprep.mubr.bf16.mxu0 0
  %219 = vmatmul.mubr.bf16.gmra.mrb[0].mxu0 %v115
  %v220 = vpop.f32.mrb[0].mxu0
  %v221 = vadd.f32 0.0, %v220
  %v222 = vpop.f32.mrb[0].mxu0
  %v223 = vpop.f32.mrb[0].mxu0
  %v224 = vadd.f32 0.0, %v223
  %v225 = vpop.f32.mrb[0].mxu0
  %226 = vmatprep.mubr.bf16.mxu0 0
  %227 = vmatmul.mubr.bf16.gmra.mrb[0].mxu0 %v116
  %v228 = vpop.f32.mrb[0].mxu0
  %v229 = vadd.f32 0.0, %v228
  %v230 = vpop.f32.mrb[0].mxu0
  %v231 = vpop.f32.mrb[0].mxu0
  %v232 = vadd.f32 0.0, %v231
  %v233 = vpop.f32.mrb[0].mxu0
  %234 = vmatprep.mubr.bf16.mxu0 0
  %235 = vmatmul.mubr.bf16.gmra.mrb[0].mxu0 %v117
  %v236 = vpop.f32.mrb[0].mxu0
  %v237 = vadd.f32 0.0, %v236
  %v238 = vpop.f32.mrb[0].mxu0
  %v239 = vpop.f32.mrb[0].mxu0
  %v240 = vadd.f32 0.0, %v239
  %v241 = vpop.f32.mrb[0].mxu0
  %242 = vmatprep.mubr.bf16.mxu0 0
  %243 = vmatmul.mubr.bf16.gmra.mrb[0].mxu0 %v118
  %v244 = vpop.f32.mrb[0].mxu0
  %v245 = vadd.f32 0.0, %v244
  %v246 = vpop.f32.mrb[0].mxu0
  %v247 = vpop.f32.mrb[0].mxu0
  %v248 = vadd.f32 0.0, %v247
  %v249 = vpop.f32.mrb[0].mxu0
  %250 = vmatprep.mubr.bf16.mxu0 0
  %251 = vmatmul.mubr.bf16.gmra.mrb[0].mxu0 %v119
  %v252 = vpop.f32.mrb[0].mxu0
  %v253 = vadd.f32 0.0, %v252
  %v254 = vpop.f32.mrb[0].mxu0
  %v255 = vpop.f32.mrb[0].mxu0
  %v256 = vadd.f32 0.0, %v255
  %v257 = vpop.f32.mrb[0].mxu0
  %258 = vmatprep.mubr.bf16.mxu0 0
  %259 = vmatmul.mubr.bf16.gmra.mrb[0].mxu0 %v120
  %v260 = vpop.f32.mrb[0].mxu0
  %v261 = vadd.f32 0.0, %v260
  %v262 = vpop.f32.mrb[0].mxu0
  %v263 = vpop.f32.mrb[0].mxu0
  %v264 = vadd.f32 0.0, %v263
  %v265 = vpop.f32.mrb[0].mxu0
  %266 = vmatprep.mubr.bf16.mxu0 0
  %267 = vmatmul.mubr.bf16.gmra.mrb[0].mxu0 %v121
  %v268 = vpop.f32.mrb[0].mxu0
  %v269 = vadd.f32 0.0, %v268
  %v270 = vpop.f32.mrb[0].mxu0
  %v271 = vpop.f32.mrb[0].mxu0
  %v272 = vadd.f32 0.0, %v271
  %v273 = vpop.f32.mrb[0].mxu0
  %274 = vdwg.mxu0
  %v275 = vadd.f32 %v34, %v213
  %v276 = vadd.f32 %v35, %v216
  %v277 = vadd.f32 %v36, %v221
  %v278 = vadd.f32 %v37, %v224
  %v279 = vadd.f32 %v38, %v229
  %v280 = vadd.f32 %v39, %v232
  %v281 = vadd.f32 %v40, %v237
  %v282 = vadd.f32 %v41, %v240
  %v283 = vadd.f32 %v42, %v245
  %v284 = vadd.f32 %v43, %v248
  %v285 = vadd.f32 %v44, %v253
  %v286 = vadd.f32 %v45, %v256
  %v287 = vadd.f32 %v46, %v261
  %v288 = vadd.f32 %v47, %v264
  %v289 = vadd.f32 %v48, %v269
  %v290 = vadd.f32 %v49, %v272
  %291 = vst [vmem:[#allocation2] sm:$0xff] %v275
  %292 = vst [vmem:[#allocation2 + $0x8] sm:$0xff] %v276
  %293 = vst [vmem:[#allocation2 + $0x10] sm:$0xff] %v277
  %294 = vst [vmem:[#allocation2 + $0x18] sm:$0xff] %v278
  %295 = vst [vmem:[#allocation2 + $0x20] sm:$0xff] %v279
  %296 = vst [vmem:[#allocation2 + $0x28] sm:$0xff] %v280
  %297 = vst [vmem:[#allocation2 + $0x30] sm:$0xff] %v281
  %298 = vst [vmem:[#allocation2 + $0x38] sm:$0xff] %v282
  %299 = vst [vmem:[#allocation2 + $0x40] sm:$0xff] %v283
  %300 = vst [vmem:[#allocation2 + $0x48] sm:$0xff] %v284
  %301 = vst [vmem:[#allocation2 + $0x50] sm:$0xff] %v285
  %302 = vst [vmem:[#allocation2 + $0x58] sm:$0xff] %v286
  %303 = vst [vmem:[#allocation2 + $0x60] sm:$0xff] %v287
  %304 = vst [vmem:[#allocation2 + $0x68] sm:$0xff] %v288
  %305 = vst [vmem:[#allocation2 + $0x70] sm:$0xff] %v289
  %306 = vst [vmem:[#allocation2 + $0x78] sm:$0xff] %v290
  // Predicated region
  $region14: #{unet_block_down.2} parent=0 // pred_check
    %p307 = pneg %p14
  $region15: #{unet_block_down.2} parent=0 // pred_check_branch
    %309 = sbr.rel (%p307) target = $region17
  $region16: #{unet_block_down.2} parent=0 // pred_region
    %v310 = vld [vmem:[#allocation2] sm:$0xff]
    %v311 = vld [vmem:[#allocation2 + $0x8] sm:$0xff]
    %v312 = vld [vmem:[#allocation2 + $0x10] sm:$0xff]
    %v313 = vld [vmem:[#allocation2 + $0x18] sm:$0xff]
    %v314 = vld [vmem:[#allocation2 + $0x20] sm:$0xff]
    %v315 = vld [vmem:[#allocation2 + $0x28] sm:$0xff]
    %v316 = vld [vmem:[#allocation2 + $0x30] sm:$0xff]
    %v317 = vld [vmem:[#allocation2 + $0x38] sm:$0xff]
    %v318 = vld [vmem:[#allocation2 + $0x40] sm:$0xff]
    %v319 = vld [vmem:[#allocation2 + $0x48] sm:$0xff]
    %v320 = vld [vmem:[#allocation2 + $0x50] sm:$0xff]
    %v321 = vld [vmem:[#allocation2 + $0x58] sm:$0xff]
    %v322 = vld [vmem:[#allocation2 + $0x60] sm:$0xff]
    %v323 = vld [vmem:[#allocation2 + $0x68] sm:$0xff]
    %v324 = vld [vmem:[#allocation2 + $0x70] sm:$0xff]
    %v325 = vld [vmem:[#allocation2 + $0x78] sm:$0xff]
    %v326 = vpack.c.bf16 %v311, %v310
    %v327 = vpack.c.bf16 %v313, %v312
    %v328 = vpack.c.bf16 %v315, %v314
    %v329 = vpack.c.bf16 %v317, %v316
    %v330 = vpack.c.bf16 %v319, %v318
    %v331 = vpack.c.bf16 %v321, %v320
    %v332 = vpack.c.bf16 %v323, %v322
    %v333 = vpack.c.bf16 %v325, %v324
    %v342 = vunpack.c.l.b16 %v326
    %v343 = vunpack.c.h.b16 %v326
    %v344 = vunpack.c.l.b16 %v327
    %v345 = vunpack.c.h.b16 %v327
    %v346 = vunpack.c.l.b16 %v328
    %v347 = vunpack.c.h.b16 %v328
    %v348 = vunpack.c.l.b16 %v329
    %v349 = vunpack.c.h.b16 %v329
    %v350 = vunpack.c.l.b16 %v330
    %v351 = vunpack.c.h.b16 %v330
    %v352 = vunpack.c.l.b16 %v331
    %v353 = vunpack.c.h.b16 %v331
    %v354 = vunpack.c.l.b16 %v332
    %v355 = vunpack.c.h.b16 %v332
    %v356 = vunpack.c.l.b16 %v333
    %v357 = vunpack.c.h.b16 %v333
    %v358 = vpack.c.b16 %v342, %v342
    %v359 = vpack.c.b16 %v343, %v343
    %v360 = vpack.c.b16 %v344, %v344
    %v361 = vpack.c.b16 %v345, %v345
    %v362 = vpack.c.b16 %v346, %v346
    %v363 = vpack.c.b16 %v347, %v347
    %v364 = vpack.c.b16 %v348, %v348
    %v365 = vpack.c.b16 %v349, %v349
    %v366 = vpack.c.b16 %v350, %v350
    %v367 = vpack.c.b16 %v351, %v351
    %v368 = vpack.c.b16 %v352, %v352
    %v369 = vpack.c.b16 %v353, %v353
    %v370 = vpack.c.b16 %v354, %v354
    %v371 = vpack.c.b16 %v355, %v355
    %v372 = vpack.c.b16 %v356, %v356
    %v373 = vpack.c.b16 %v357, %v357
    %390 = vst [vmem:[%s2] sm:$0xf] %v358
    %391 = vst [vmem:[%s2 + $0x4] sm:$0xf] %v359
    %392 = vst [vmem:[%s2 + $0x8] sm:$0xf] %v360
    %393 = vst [vmem:[%s2 + $0xc] sm:$0xf] %v361
    %394 = vst [vmem:[%s2 + $0x10] sm:$0xf] %v362
    %395 = vst [vmem:[%s2 + $0x14] sm:$0xf] %v363
    %396 = vst [vmem:[%s2 + $0x18] sm:$0xf] %v364
    %397 = vst [vmem:[%s2 + $0x1c] sm:$0xf] %v365
    %398 = vst [vmem:[%s2 + $0x20] sm:$0xf] %v366
    %399 = vst [vmem:[%s2 + $0x24] sm:$0xf] %v367
    %400 = vst [vmem:[%s2 + $0x28] sm:$0xf] %v368
    %401 = vst [vmem:[%s2 + $0x2c] sm:$0xf] %v369
    %402 = vst [vmem:[%s2 + $0x30] sm:$0xf] %v370
    %403 = vst [vmem:[%s2 + $0x34] sm:$0xf] %v371
    %404 = vst [vmem:[%s2 + $0x38] sm:$0xf] %v372
    %405 = vst [vmem:[%s2 + $0x3c] sm:$0xf] %v373
    %v406 = vadd.f32 %v310, %v311
    %v407 = vadd.f32 %v406, %v312
    %v408 = vadd.f32 %v407, %v313
    %v409 = vadd.f32 %v408, %v314
    %v410 = vadd.f32 %v409, %v315
    %v411 = vadd.f32 %v410, %v316
    %v412 = vadd.f32 %v411, %v317
    %v413 = vadd.f32 %v412, %v318
    %v414 = vadd.f32 %v413, %v319
    %v415 = vadd.f32 %v414, %v320
    %v416 = vadd.f32 %v415, %v321
    %v417 = vadd.f32 %v416, %v322
    %v418 = vadd.f32 %v417, %v323
    %v419 = vadd.f32 %v418, %v324
    %v420 = vadd.f32 %v419, %v325
    %v421 = vrot.slane %v420, 4
    %v422 = vadd.f32 %v420, %v421
    %v423 = vrot.slane %v422, 2
    %v424 = vadd.f32 %v422, %v423
    %v425 = vrot.slane %v424, 1
    %v426 = vadd.f32 %v424, %v425
    %427 = vst [vmem:[%s3] sm:$0x1] %v426
    %v428 = vmul.f32 %v310, %v310
    %v429 = vmul.f32 %v311, %v311
    %v430 = vmul.f32 %v312, %v312
    %v431 = vmul.f32 %v313, %v313
    %v432 = vmul.f32 %v314, %v314
    %v433 = vmul.f32 %v315, %v315
    %v434 = vmul.f32 %v316, %v316
    %v435 = vmul.f32 %v317, %v317
    %v436 = vmul.f32 %v318, %v318
    %v437 = vmul.f32 %v319, %v319
    %v438 = vmul.f32 %v320, %v320
    %v439 = vmul.f32 %v321, %v321
    %v440 = vmul.f32 %v322, %v322
    %v441 = vmul.f32 %v323, %v323
    %v442 = vmul.f32 %v324, %v324
    %v443 = vmul.f32 %v325, %v325
    %v444 = vadd.f32 %v428, %v429
    %v445 = vadd.f32 %v444, %v430
    %v446 = vadd.f32 %v445, %v431
    %v447 = vadd.f32 %v446, %v432
    %v448 = vadd.f32 %v447, %v433
    %v449 = vadd.f32 %v448, %v434
    %v450 = vadd.f32 %v449, %v435
    %v451 = vadd.f32 %v450, %v436
    %v452 = vadd.f32 %v451, %v437
    %v453 = vadd.f32 %v452, %v438
    %v454 = vadd.f32 %v453, %v439
    %v455 = vadd.f32 %v454, %v440
    %v456 = vadd.f32 %v455, %v441
    %v457 = vadd.f32 %v456, %v442
    %v458 = vadd.f32 %v457, %v443
    %v459 = vrot.slane %v458, 4
    %v460 = vadd.f32 %v458, %v459
    %v461 = vrot.slane %v460, 2
    %v462 = vadd.f32 %v460, %v461
    %v463 = vrot.slane %v462, 1
    %v464 = vadd.f32 %v462, %v463
    %465 = vst [vmem:[%s3 + $0x1] sm:$0x1] %v464
  $region17: #{unet_block_down.2} parent=0 // pred_fallthru
    _
  // Predicated region
  $region18: #{unet_block_down.2} parent=0 // pred_check
    _
  $region19: #{unet_block_down.2} parent=0 // pred_check_branch
    %467 = sbr.rel (0) target = $region21
  $region20: #{unet_block_down.2} parent=0 // pred_region
    _
  $region21: #{unet_block_down.2} parent=0 // pred_fallthru
    _
  // Predicated region
  $region22: #{unet_block_down.2} parent=0 // pred_check
    _
  $region23: #{unet_block_down.2} parent=0 // pred_check_branch
    %469 = sbr.rel (0) target = $region25
  $region24: #{unet_block_down.2} parent=0 // pred_region
    _
  $region25: #{unet_block_down.2} parent=0 // pred_fallthru
    _
  // Predicated region
  $region26: #{unet_block_down.2} parent=0 // pred_check
    _
  $region27: #{unet_block_down.2} parent=0 // pred_check_branch
    %471 = sbr.rel (0) target = $region29
  $region28: #{unet_block_down.2} parent=0 // pred_region
    _
  $region29: #{unet_block_down.2} parent=0 // pred_fallthru
    _
  // Predicated region
  $region30: #{unet_block_down.2} parent=0 // pred_check
    _
  $region31: #{unet_block_down.2} parent=0 // pred_check_branch
    %473 = sbr.rel (0) target = $region33
  $region32: #{unet_block_down.2} parent=0 // pred_region
    _
  $region33: #{unet_block_down.2} parent=0 // pred_fallthru
    _

</llo_original>
